<compile_context>
chip_gen: v6e
topology: v6e:2x2x1
jax: 0.10.0
libtpu: 0.0.40
codegen_flags: <defaults>
</compile_context>

<pallas_src>
import jax
import jax.numpy as jnp
from jax.experimental import pallas as pl
from jax.experimental.pallas import tpu as pltpu

NEG_SLOPE = 0.01  # torch.nn.LeakyReLU default


def _mlp_softmax_kernel(x_ref, w1_ref, b1_ref, w2_ref, b2_ref, w3_ref, b3_ref,
                        o_ref):
    x = x_ref[...]                                   # (C, TN)  f32
    w1 = w1_ref[...]                                 # (E, C)   f32
    C = w1.shape[1]

    # ---- Layer 1 on the VPU: h = W1 @ X + b1 as an outer-product sum over the
    # tiny K = C axis (an MXU contraction with K=4 is >96% zero padding).
    h = b1_ref[...] + w1[:, 0:1] * x[0:1, :]         # (E, TN)  f32
    for c in range(1, C):                            # static unroll, C is tiny
        h = h + w1[:, c:c + 1] * x[c:c + 1, :]
    h = jnp.maximum(h, NEG_SLOPE * h)                # LeakyReLU, 2 VPU ops

    # ---- Layer 2 on the MXU (bf16 operands, f32 accumulate):  (E,E)@(E,TN)
    h = jnp.dot(w2_ref[...], h.astype(jnp.bfloat16),
                preferred_element_type=jnp.float32) + b2_ref[...]
    h = jnp.maximum(h, NEG_SLOPE * h)

    # ---- Layer 3 on the MXU (bf16 operands, f32 accumulate):  (C,E)@(E,TN)
    logits = jnp.dot(w3_ref[...], h.astype(jnp.bfloat16),
                     preferred_element_type=jnp.float32) + b3_ref[...]

    # ---- Numerically stable softmax over the candidate axis (sublanes).
    m = jnp.max(logits, axis=0, keepdims=True)       # (1, TN)
    e = jnp.exp(logits - m)
    denom = jnp.sum(e, axis=0, keepdims=True)        # (1, TN)
    o_ref[...] = (e / denom).astype(o_ref.dtype)     # exact division: rows sum to 1


def mlp_strategy_forward(edge_attr, params, edge_index=None, candidate_idxs=None,
                         *, tn=8192):
    """Forward pass of MLPStrategyModel.

    params holds torch-layout (out, in) weights:
      w1 (E, C), b1 (E, 1), w2 (E, E), b2 (E, 1), w3 (C, E), b3 (C, 1).
    `tn` is the (upper bound on the) lane-tile size over the flattened ballots.
    edge_index / candidate_idxs are accepted for API parity and unused.
    """
    w1 = params["w1"].astype(jnp.float32)
    b1 = params["b1"].astype(jnp.float32)
    w2 = params["w2"].astype(jnp.bfloat16)           # MXU operand: cast once here
    b2 = params["b2"].astype(jnp.float32)
    w3 = params["w3"].astype(jnp.bfloat16)           # MXU operand: cast once here
    b3 = params["b3"].astype(jnp.float32)
    E, C = w1.shape

    votes = edge_attr.reshape(-1, C).astype(jnp.float32)
    N = votes.shape[0]
    x_t = votes.T                                    # (C, N) lane-dense ballots

    # Lane-tile size: multiple of 128, capped so the 1-D grid has >= 2 steps
    # whenever N allows it (keeps both v7x TensorCores busy; the extra ~0.35 us
    # grid step is noise on single-TC v5e/v6e).
    TN = min(int(tn), 128 * pl.cdiv(pl.cdiv(N, 2), 128))
    TN = max(128, (TN // 128) * 128)
    n_pad = pl.cdiv(N, TN) * TN
    if n_pad != N:
        # Zero-padded tail columns give finite (bias-only) softmax values and
        # are sliced off below.
        x_t = jnp.pad(x_t, ((0, 0), (0, n_pad - N)))

    grid = (n_pad // TN,)
    const = lambda shape: pl.BlockSpec(shape, lambda i: (0, 0))  # fetched once, VMEM-resident

    out_t = pl.pallas_call(
        _mlp_softmax_kernel,
        out_shape=jax.ShapeDtypeStruct((C, n_pad), jnp.float32),
        grid=grid,
        in_specs=[
            pl.BlockSpec((C, TN), lambda i: (0, i)),             # ballot tile (lanes = N)
            const(w1.shape), const(b1.shape),
            const(w2.shape), const(b2.shape),
            const(w3.shape), const(b3.shape),
        ],
        out_specs=pl.BlockSpec((C, TN), lambda i: (0, i)),
        compiler_params=pltpu.CompilerParams(
            dimension_semantics=("parallel",),       # independent tiles (v7x: 2 TCs)
            vmem_limit_bytes=32 * 1024 * 1024,       # safe on v5e/v6e (128 MiB) and v7x (64 MiB)
        ),
    )(x_t, w1, b1, w2, b2, w3, b3)

    return out_t[:, :N].T.reshape(edge_attr.shape)


def init_params(key, num_candidates, emb_dim=32):
    """torch.nn.Linear-style init: U(-1/sqrt(fan_in), 1/sqrt(fan_in)), (out, in) layout."""
    ks = jax.random.split(key, 6)

    def lin(kw, kb, fan_in, fan_out):
        bound = 1.0 / jnp.sqrt(float(fan_in))
        w = jax.random.uniform(kw, (fan_out, fan_in), jnp.float32, -bound, bound)
        b = jax.random.uniform(kb, (fan_out, 1), jnp.float32, -bound, bound)
        return w, b

    w1, b1 = lin(ks[0], ks[1], num_candidates, emb_dim)
    w2, b2 = lin(ks[2], ks[3], emb_dim, emb_dim)
    w3, b3 = lin(ks[4], ks[5], emb_dim, num_candidates)
    return dict(w1=w1, b1=b1, w2=w2, b2=b2, w3=w3, b3=b3)


def _reference(edge_attr, params):
    """Pure-JAX reference (row-major layout, exact softmax) for correctness check."""
    w1, b1 = params["w1"], params["b1"]
    C = w1.shape[1]
    x = edge_attr.reshape(-1, C).astype(jnp.float32)
    h = x @ w1.T + b1[:, 0]
    h = jnp.where(h > 0, h, NEG_SLOPE * h)
    h = h @ params["w2"].T + params["b2"][:, 0]
    h = jnp.where(h > 0, h, NEG_SLOPE * h)
    logits = h @ params["w3"].T + params["b3"][:, 0]
    y = jax.nn.softmax(logits, axis=-1)
    return y.reshape(edge_attr.shape)


if __name__ == "__main__":
    key = jax.random.PRNGKey(0)
    k_param, k_x1, k_x2 = jax.random.split(key, 3)

    num_candidates = 4
    emb_dim = 32
    params = init_params(k_param, num_candidates, emb_dim)

    # edge_index / candidate_idxs are unused by the forward pass (kept for API parity).
    edge_index = jnp.zeros((2, 16), dtype=jnp.int32)
    candidate_idxs = jnp.arange(num_candidates, dtype=jnp.int32)

    # Tolerance accounts for explicit bf16 MXU operands in layers 2/3 (the f32
    # reference matmuls are themselves bf16-truncated on the MXU at DEFAULT
    # precision, so both paths carry comparable rounding).
    TOL = 3e-3

    # Case 1: small input, single grid step.
    edge_attr_a = jax.random.normal(k_x1, (16, num_candidates), dtype=jnp.float32)
    out_a = jax.block_until_ready(
        mlp_strategy_forward(edge_attr_a, params, edge_index, candidate_idxs))
    ref_a = _reference(edge_attr_a, params)
    assert out_a.shape == edge_attr_a.shape
    assert jnp.allclose(out_a, ref_a, atol=TOL, rtol=TOL), "mismatch vs reference (case 1)"
    assert jnp.allclose(jnp.sum(out_a, axis=-1), 1.0, atol=1e-5)  # exact-normalized softmax

    # Case 2: multi-tile grid with a ragged tail (N=300, TN=128 -> 3 grid steps + padding).
    edge_attr_b = jax.random.normal(k_x2, (300, num_candidates), dtype=jnp.float32)
    out_b = jax.block_until_ready(
        mlp_strategy_forward(edge_attr_b, params, edge_index, candidate_idxs, tn=128))
    ref_b = _reference(edge_attr_b, params)
    assert out_b.shape == edge_attr_b.shape
    assert jnp.allclose(out_b, ref_b, atol=TOL, rtol=TOL), "mismatch vs reference (case 2)"
    assert jnp.allclose(jnp.sum(out_b, axis=-1), 1.0, atol=1e-5)

    print("KERNEL_OK")
</pallas_src>

<mosaic_0001>
module attributes {stable_mosaic.version = 11 : i64} {
  func.func @_mlp_softmax_kernel(%arg0: i32, %arg1: memref<4x128xf32, #tpu.memory_space<vmem>>, %arg2: memref<32x4xf32, #tpu.memory_space<vmem>>, %arg3: memref<32x1xf32, #tpu.memory_space<vmem>>, %arg4: memref<32x32xbf16, #tpu.memory_space<vmem>>, %arg5: memref<32x1xf32, #tpu.memory_space<vmem>>, %arg6: memref<4x32xbf16, #tpu.memory_space<vmem>>, %arg7: memref<4x1xf32, #tpu.memory_space<vmem>>, %arg8: memref<4x128xf32, #tpu.memory_space<vmem>>) attributes {dimension_semantics = [#tpu.dimension_semantics<parallel>], iteration_bounds = array<i64: 1>, scalar_prefetch = 0 : i64, scratch_operands = 0 : i64, tpu.core_type = #tpu.core_type<tc>, window_params = [{transform_indices = @transform_0, window_bounds = array<i64: 4, 128>}, {pipeline_mode = #tpu.pipeline_mode<synchronous>, transform_indices = @transform_1, window_bounds = array<i64: 32, 4>}, {pipeline_mode = #tpu.pipeline_mode<synchronous>, transform_indices = @transform_2, window_bounds = array<i64: 32, 1>}, {pipeline_mode = #tpu.pipeline_mode<synchronous>, transform_indices = @transform_3, window_bounds = array<i64: 32, 32>}, {pipeline_mode = #tpu.pipeline_mode<synchronous>, transform_indices = @transform_4, window_bounds = array<i64: 32, 1>}, {pipeline_mode = #tpu.pipeline_mode<synchronous>, transform_indices = @transform_5, window_bounds = array<i64: 4, 32>}, {pipeline_mode = #tpu.pipeline_mode<synchronous>, transform_indices = @transform_6, window_bounds = array<i64: 4, 1>}, {transform_indices = @transform_7, window_bounds = array<i64: 4, 128>}]} {
    %c0 = arith.constant 0 : index
    %c0_0 = arith.constant 0 : index
    %0 = vector.load %arg1[%c0, %c0_0] : memref<4x128xf32, #tpu.memory_space<vmem>>, vector<4x128xf32>
    %c0_1 = arith.constant 0 : index
    %c0_2 = arith.constant 0 : index
    %1 = vector.load %arg2[%c0_1, %c0_2] : memref<32x4xf32, #tpu.memory_space<vmem>>, vector<32x4xf32>
    %c0_3 = arith.constant 0 : index
    %c0_4 = arith.constant 0 : index
    %2 = vector.load %arg3[%c0_3, %c0_4] : memref<32x1xf32, #tpu.memory_space<vmem>>, vector<32x1xf32>
    %3 = vector.extract_strided_slice %1 {offsets = [0, 0], sizes = [32, 1], strides = [1, 1]} : vector<32x4xf32> to vector<32x1xf32>
    %4 = vector.extract_strided_slice %0 {offsets = [0, 0], sizes = [1, 128], strides = [1, 1]} : vector<4x128xf32> to vector<1x128xf32>
    %5 = vector.broadcast %3 : vector<32x1xf32> to vector<32x128xf32>
    %6 = vector.broadcast %4 : vector<1x128xf32> to vector<32x128xf32>
    %7 = arith.mulf %5, %6 : vector<32x128xf32>
    %8 = vector.broadcast %2 : vector<32x1xf32> to vector<32x128xf32>
    %9 = arith.addf %8, %7 : vector<32x128xf32>
    %10 = vector.extract_strided_slice %1 {offsets = [0, 1], sizes = [32, 1], strides = [1, 1]} : vector<32x4xf32> to vector<32x1xf32>
    %11 = vector.extract_strided_slice %0 {offsets = [1, 0], sizes = [1, 128], strides = [1, 1]} : vector<4x128xf32> to vector<1x128xf32>
    %12 = vector.broadcast %10 : vector<32x1xf32> to vector<32x128xf32>
    %13 = vector.broadcast %11 : vector<1x128xf32> to vector<32x128xf32>
    %14 = arith.mulf %12, %13 : vector<32x128xf32>
    %15 = arith.addf %9, %14 : vector<32x128xf32>
    %16 = vector.extract_strided_slice %1 {offsets = [0, 2], sizes = [32, 1], strides = [1, 1]} : vector<32x4xf32> to vector<32x1xf32>
    %17 = vector.extract_strided_slice %0 {offsets = [2, 0], sizes = [1, 128], strides = [1, 1]} : vector<4x128xf32> to vector<1x128xf32>
    %18 = vector.broadcast %16 : vector<32x1xf32> to vector<32x128xf32>
    %19 = vector.broadcast %17 : vector<1x128xf32> to vector<32x128xf32>
    %20 = arith.mulf %18, %19 : vector<32x128xf32>
    %21 = arith.addf %15, %20 : vector<32x128xf32>
    %22 = vector.extract_strided_slice %1 {offsets = [0, 3], sizes = [32, 1], strides = [1, 1]} : vector<32x4xf32> to vector<32x1xf32>
    %23 = vector.extract_strided_slice %0 {offsets = [3, 0], sizes = [1, 128], strides = [1, 1]} : vector<4x128xf32> to vector<1x128xf32>
    %24 = vector.broadcast %22 : vector<32x1xf32> to vector<32x128xf32>
    %25 = vector.broadcast %23 : vector<1x128xf32> to vector<32x128xf32>
    %26 = arith.mulf %24, %25 : vector<32x128xf32>
    %27 = arith.addf %21, %26 : vector<32x128xf32>
    %cst = arith.constant 0.00999999977 : f32
    %28 = vector.broadcast %cst : f32 to vector<32x128xf32>
    %29 = arith.mulf %28, %27 : vector<32x128xf32>
    %30 = arith.maximumf %27, %29 : vector<32x128xf32>
    %c0_5 = arith.constant 0 : index
    %c0_6 = arith.constant 0 : index
    %31 = vector.load %arg4[%c0_5, %c0_6] : memref<32x32xbf16, #tpu.memory_space<vmem>>, vector<32x32xbf16>
    %32 = arith.truncf %30 : vector<32x128xf32> to vector<32x128xbf16>
    %cst_7 = arith.constant dense<0.000000e+00> : vector<32x128xf32>
    %33 = tpu.matmul %31, %32, %cst_7 {dimension_numbers = #tpu.dot_dimension_numbers<[1], [0], [0], [1], [0, 0, 1, 1], [], []>} : vector<32x32xbf16>, vector<32x128xbf16>, vector<32x128xf32> -> vector<32x128xf32>
    %c0_8 = arith.constant 0 : index
    %c0_9 = arith.constant 0 : index
    %34 = vector.load %arg5[%c0_8, %c0_9] : memref<32x1xf32, #tpu.memory_space<vmem>>, vector<32x1xf32>
    %35 = vector.broadcast %34 : vector<32x1xf32> to vector<32x128xf32>
    %36 = arith.addf %33, %35 : vector<32x128xf32>
    %cst_10 = arith.constant 0.00999999977 : f32
    %37 = vector.broadcast %cst_10 : f32 to vector<32x128xf32>
    %38 = arith.mulf %37, %36 : vector<32x128xf32>
    %39 = arith.maximumf %36, %38 : vector<32x128xf32>
    %c0_11 = arith.constant 0 : index
    %c0_12 = arith.constant 0 : index
    %40 = vector.load %arg6[%c0_11, %c0_12] : memref<4x32xbf16, #tpu.memory_space<vmem>>, vector<4x32xbf16>
    %41 = arith.truncf %39 : vector<32x128xf32> to vector<32x128xbf16>
    %cst_13 = arith.constant dense<0.000000e+00> : vector<4x128xf32>
    %42 = tpu.matmul %40, %41, %cst_13 {dimension_numbers = #tpu.dot_dimension_numbers<[1], [0], [0], [1], [0, 0, 1, 1], [], []>} : vector<4x32xbf16>, vector<32x128xbf16>, vector<4x128xf32> -> vector<4x128xf32>
    %c0_14 = arith.constant 0 : index
    %c0_15 = arith.constant 0 : index
    %43 = vector.load %arg7[%c0_14, %c0_15] : memref<4x1xf32, #tpu.memory_space<vmem>>, vector<4x1xf32>
    %44 = vector.broadcast %43 : vector<4x1xf32> to vector<4x128xf32>
    %45 = arith.addf %42, %44 : vector<4x128xf32>
    %cst_16 = arith.constant dense<0xFF800000> : vector<128xf32>
    %46 = vector.multi_reduction <maximumf>, %45, %cst_16 [0] : vector<4x128xf32> to vector<128xf32>
    %47 = vector.shape_cast %46 : vector<128xf32> to vector<1x128xf32>
    %48 = vector.broadcast %47 : vector<1x128xf32> to vector<4x128xf32>
    %49 = arith.subf %45, %48 : vector<4x128xf32>
    %50 = math.exp %49 : vector<4x128xf32>
    %cst_17 = arith.constant dense<0.000000e+00> : vector<128xf32>
    %51 = vector.multi_reduction <add>, %50, %cst_17 [0] : vector<4x128xf32> to vector<128xf32>
    %52 = vector.shape_cast %51 : vector<128xf32> to vector<1x128xf32>
    %53 = vector.broadcast %52 : vector<1x128xf32> to vector<4x128xf32>
    %54 = arith.divf %50, %53 : vector<4x128xf32>
    %c0_18 = arith.constant 0 : index
    %c0_19 = arith.constant 0 : index
    %55 = vector.load %arg8[%c0_18, %c0_19] : memref<4x128xf32, #tpu.memory_space<vmem>>, vector<4x128xf32>
    tpu.vector_store %arg8[%c0_18, %c0_19], %54 {strides = array<i32>} : memref<4x128xf32, #tpu.memory_space<vmem>>, vector<4x128xf32>,
    return
  }
  func.func @transform_0(%arg0: i32) -> (i32, i32) {
    %c0_i32 = arith.constant 0 : i32
    %c0_i32_0 = arith.constant 0 : i32
    return %c0_i32, %arg0 : i32, i32
  }
  func.func @transform_1(%arg0: i32) -> (i32, i32) {
    %c0_i32 = arith.constant 0 : i32
    %c0_i32_0 = arith.constant 0 : i32
    %c0_i32_1 = arith.constant 0 : i32
    return %c0_i32, %c0_i32_0 : i32, i32
  }
  func.func @transform_2(%arg0: i32) -> (i32, i32) {
    %c0_i32 = arith.constant 0 : i32
    %c0_i32_0 = arith.constant 0 : i32
    %c0_i32_1 = arith.constant 0 : i32
    return %c0_i32, %c0_i32_0 : i32, i32
  }
  func.func @transform_3(%arg0: i32) -> (i32, i32) {
    %c0_i32 = arith.constant 0 : i32
    %c0_i32_0 = arith.constant 0 : i32
    %c0_i32_1 = arith.constant 0 : i32
    return %c0_i32, %c0_i32_0 : i32, i32
  }
  func.func @transform_4(%arg0: i32) -> (i32, i32) {
    %c0_i32 = arith.constant 0 : i32
    %c0_i32_0 = arith.constant 0 : i32
    %c0_i32_1 = arith.constant 0 : i32
    return %c0_i32, %c0_i32_0 : i32, i32
  }
  func.func @transform_5(%arg0: i32) -> (i32, i32) {
    %c0_i32 = arith.constant 0 : i32
    %c0_i32_0 = arith.constant 0 : i32
    %c0_i32_1 = arith.constant 0 : i32
    return %c0_i32, %c0_i32_0 : i32, i32
  }
  func.func @transform_6(%arg0: i32) -> (i32, i32) {
    %c0_i32 = arith.constant 0 : i32
    %c0_i32_0 = arith.constant 0 : i32
    %c0_i32_1 = arith.constant 0 : i32
    return %c0_i32, %c0_i32_0 : i32, i32
  }
  func.func @transform_7(%arg0: i32) -> (i32, i32) {
    %c0_i32 = arith.constant 0 : i32
    %c0_i32_0 = arith.constant 0 : i32
    return %c0_i32, %arg0 : i32, i32
  }
}

</mosaic_0001>

<llo_original>
// kernel: tpu_custom_call.1
$region0: #{tpu_custom_call.1}
  #allocation0 [shape = 'u32[]', space=smem, size = 0x4, offset = 0x4, fixed_abs, tag = 'smem constant byte address 0x4 - core index']
  #allocation1 [shape = 'u32[144,128]{1,0:T(1,128)}', space=vmem, size = 0x12000, scoped, tag = 'internal scratch']
  %s0 = inlined_call_operand.vmem [shape: f32[4,128], index: 0, kind: input, shape index: {}]
  %s1 = inlined_call_operand.vmem [shape: f32[32,4], index: 1, kind: input, shape index: {}]
  %s2 = inlined_call_operand.vmem [shape: f32[32,1], index: 2, kind: input, shape index: {}]
  %s3 = inlined_call_operand.vmem [shape: bf16[32,32], index: 3, kind: input, shape index: {}]
  %s4 = inlined_call_operand.vmem [shape: f32[32,1], index: 4, kind: input, shape index: {}]
  %s5 = inlined_call_operand.vmem [shape: bf16[4,32], index: 5, kind: input, shape index: {}]
  %s6 = inlined_call_operand.vmem [shape: f32[4,1], index: 6, kind: input, shape index: {}]
  %s7 = inlined_call_operand.hbm [shape: f32[4,128], index: 7, kind: output, shape index: {}]
  %s8 = sld [smem:[#allocation0]]
  $region38: #{tpu_custom_call.1} parent=0
    _
  %s10 = ssub.s32 1, %s8
  %s11 = scalar_select 0, %s10, %s8
  $region1: #{tpu_custom_call.1} parent=0
    #allocation2 [shape = 'u8[2048]{0}', space=vmem, size = 0x800, scoped, tag = 'output window, operand 0, single buffered']
    #allocation3 [shape = 's32[1]{0}', space=sflag, size = 0x4, scoped, tag = 'scoped memory for tpu_custom_call.1']
    %12 = vsyncpa [#allocation3], 0
    // Predicated region
    $region2: #{tpu_custom_call.1} parent=1 // pred_check
      _
    $region3: #{tpu_custom_call.1} parent=1 // pred_check_branch
      %14 = sbr.rel (0) target = $region5
    $region4: #{tpu_custom_call.1} parent=1 // pred_region
      _
    $region5: #{tpu_custom_call.1} parent=1 // pred_fallthru
      _
    // Predicated region
    $region6: #{tpu_custom_call.1} parent=1 // pred_check
      _
    $region7: #{tpu_custom_call.1} parent=1 // pred_check_branch
      %16 = sbr.rel (0) target = $region9
    $region8: #{tpu_custom_call.1} parent=1 // pred_region
      _
    $region9: #{tpu_custom_call.1} parent=1 // pred_fallthru
      _
    // Predicated region
    $region10: #{tpu_custom_call.1} parent=1 // pred_check
      _
    $region11: #{tpu_custom_call.1} parent=1 // pred_check_branch
      %18 = sbr.rel (0) target = $region13
    $region12: #{tpu_custom_call.1} parent=1 // pred_region
      _
    $region13: #{tpu_custom_call.1} parent=1 // pred_fallthru
      _
    // Predicated region
    $region14: #{tpu_custom_call.1} parent=1 // pred_check
      _
    $region15: #{tpu_custom_call.1} parent=1 // pred_check_branch
      %20 = sbr.rel (0) target = $region17
    $region16: #{tpu_custom_call.1} parent=1 // pred_region
      _
    $region17: #{tpu_custom_call.1} parent=1 // pred_fallthru
      _
    // Predicated region
    $region18: #{tpu_custom_call.1} parent=1 // pred_check
      _
    $region19: #{tpu_custom_call.1} parent=1 // pred_check_branch
      %22 = sbr.rel (0) target = $region21
    $region20: #{tpu_custom_call.1} parent=1 // pred_region
      _
    $region21: #{tpu_custom_call.1} parent=1 // pred_fallthru
      _
    // Predicated region
    $region22: #{tpu_custom_call.1} parent=1 // pred_check
      _
    $region23: #{tpu_custom_call.1} parent=1 // pred_check_branch
      %24 = sbr.rel (0) target = $region25
    $region24: #{tpu_custom_call.1} parent=1 // pred_region
      _
    $region25: #{tpu_custom_call.1} parent=1 // pred_fallthru
      _
    // Predicated region
    $region26: #{tpu_custom_call.1} parent=1 // pred_check
      _
    $region27: #{tpu_custom_call.1} parent=1 // pred_check_branch
      %26 = sbr.rel (0) target = $region29
    $region28: #{tpu_custom_call.1} parent=1 // pred_region
      _
    $region29: #{tpu_custom_call.1} parent=1 // pred_fallthru
      _
    %v28 = vld [vmem:[%s0] sm:$0xf]
    %v29 = vld [vmem:[%s1] sm:$0xff]
    %v30 = vld [vmem:[%s1 + $0x8] sm:$0xff]
    %v31 = vld [vmem:[%s1 + $0x10] sm:$0xff]
    %v32 = vld [vmem:[%s1 + $0x18] sm:$0xff]
    %v33 = vld [vmem:[%s2] sm:$0xff]
    %v34 = vld [vmem:[%s2 + $0x8] sm:$0xff]
    %v35 = vld [vmem:[%s2 + $0x10] sm:$0xff]
    %v36 = vld [vmem:[%s2 + $0x18] sm:$0xff]
    %38 = vset.pattern.permute.xlu0 0
    %39 = vperm.xlu0 %38, %v29
    %v40 = vpop.permute.xlu0 %39
    %43 = vset.pattern.permute.xlu0 0
    %44 = vperm.xlu0 %43, %v30
    %v45 = vpop.permute.xlu0 %44
    %48 = vset.pattern.permute.xlu0 0
    %49 = vperm.xlu0 %48, %v31
    %v50 = vpop.permute.xlu0 %49
    %53 = vset.pattern.permute.xlu0 0
    %54 = vperm.xlu0 %53, %v32
    %v55 = vpop.permute.xlu0 %54
    %v57 = vlaneseq
    %v58 = vshrl.u32 %v57, 7
    %v59 = vsub.s32 0, %v58
    %v60 = vrot.slane %v28, %v59
    %v61 = vmul.f32 %v40, %v60
    %v62 = vmul.f32 %v45, %v60
    %v63 = vmul.f32 %v50, %v60
    %v64 = vmul.f32 %v55, %v60
    %66 = vset.pattern.permute.xlu0 0
    %67 = vperm.xlu0 %66, %v33
    %v68 = vpop.permute.xlu0 %67
    %71 = vset.pattern.permute.xlu0 0
    %72 = vperm.xlu0 %71, %v34
    %v73 = vpop.permute.xlu0 %72
    %76 = vset.pattern.permute.xlu0 0
    %77 = vperm.xlu0 %76, %v35
    %v78 = vpop.permute.xlu0 %77
    %81 = vset.pattern.permute.xlu0 0
    %82 = vperm.xlu0 %81, %v36
    %v83 = vpop.permute.xlu0 %82
    %v85 = vadd.f32 %v68, %v61
    %v86 = vadd.f32 %v73, %v62
    %v87 = vadd.f32 %v78, %v63
    %v88 = vadd.f32 %v83, %v64
    %89 = vset.pattern.permute.xlu0 1
    %90 = vperm.xlu0 %89, %v29
    %v91 = vpop.permute.xlu0 %90
    %93 = vset.pattern.permute.xlu0 1
    %94 = vperm.xlu0 %93, %v30
    %v95 = vpop.permute.xlu0 %94
    %97 = vset.pattern.permute.xlu0 1
    %98 = vperm.xlu0 %97, %v31
    %v99 = vpop.permute.xlu0 %98
    %101 = vset.pattern.permute.xlu0 1
    %102 = vperm.xlu0 %101, %v32
    %v103 = vpop.permute.xlu0 %102
    %v105 = vlaneseq
    %v106 = vshrl.u32 %v105, 7
    %v107 = vsub.s32 1, %v106
    %v108 = vrot.slane %v28, %v107
    %v109 = vmul.f32 %v91, %v108
    %v110 = vmul.f32 %v95, %v108
    %v111 = vmul.f32 %v99, %v108
    %v112 = vmul.f32 %v103, %v108
    %v113 = vadd.f32 %v85, %v109
    %v114 = vadd.f32 %v86, %v110
    %v115 = vadd.f32 %v87, %v111
    %v116 = vadd.f32 %v88, %v112
    %117 = vset.pattern.permute.xlu0 2
    %118 = vperm.xlu0 %117, %v29
    %v119 = vpop.permute.xlu0 %118
    %121 = vset.pattern.permute.xlu0 2
    %122 = vperm.xlu0 %121, %v30
    %v123 = vpop.permute.xlu0 %122
    %125 = vset.pattern.permute.xlu0 2
    %126 = vperm.xlu0 %125, %v31
    %v127 = vpop.permute.xlu0 %126
    %129 = vset.pattern.permute.xlu0 2
    %130 = vperm.xlu0 %129, %v32
    %v131 = vpop.permute.xlu0 %130
    %v133 = vlaneseq
    %v134 = vshrl.u32 %v133, 7
    %v135 = vsub.s32 2, %v134
    %v136 = vrot.slane %v28, %v135
    %v137 = vmul.f32 %v119, %v136
    %v138 = vmul.f32 %v123, %v136
    %v139 = vmul.f32 %v127, %v136
    %v140 = vmul.f32 %v131, %v136
    %v141 = vadd.f32 %v113, %v137
    %v142 = vadd.f32 %v114, %v138
    %v143 = vadd.f32 %v115, %v139
    %v144 = vadd.f32 %v116, %v140
    %145 = vset.pattern.permute.xlu0 3
    %146 = vperm.xlu0 %145, %v29
    %v147 = vpop.permute.xlu0 %146
    %149 = vset.pattern.permute.xlu0 3
    %150 = vperm.xlu0 %149, %v30
    %v151 = vpop.permute.xlu0 %150
    %153 = vset.pattern.permute.xlu0 3
    %154 = vperm.xlu0 %153, %v31
    %v155 = vpop.permute.xlu0 %154
    %157 = vset.pattern.permute.xlu0 3
    %158 = vperm.xlu0 %157, %v32
    %v159 = vpop.permute.xlu0 %158
    %v161 = vlaneseq
    %v162 = vshrl.u32 %v161, 7
    %v163 = vsub.s32 3, %v162
    %v164 = vrot.slane %v28, %v163
    %v165 = vmul.f32 %v147, %v164
    %v166 = vmul.f32 %v151, %v164
    %v167 = vmul.f32 %v155, %v164
    %v168 = vmul.f32 %v159, %v164
    %v169 = vadd.f32 %v141, %v165
    %v170 = vadd.f32 %v142, %v166
    %v171 = vadd.f32 %v143, %v167
    %v172 = vadd.f32 %v144, %v168
    %v173 = vmul.f32 %v169, 0.01
    %v174 = vmul.f32 %v170, 0.01
    %v175 = vmul.f32 %v171, 0.01
    %v176 = vmul.f32 %v172, 0.01
    %v177 = vmax.f32 %v169, %v173
    %v178 = vmax.f32 %v170, %v174
    %v179 = vmax.f32 %v171, %v175
    %v180 = vmax.f32 %v172, %v176
    %v181 = vld [vmem:[%s3] sm:$0xf]
    %v182 = vld [vmem:[%s3 + $0x4] sm:$0xf]
    %v183 = vld [vmem:[%s3 + $0x8] sm:$0xf]
    %v184 = vld [vmem:[%s3 + $0xc] sm:$0xf]
    %v185 = vpack.c.bf16 %v178, %v177
    %v186 = vpack.c.bf16 %v180, %v179
    %v187 = vld [vmem:[%s4] sm:$0xff]
    %v188 = vld [vmem:[%s4 + $0x8] sm:$0xff]
    %v189 = vld [vmem:[%s4 + $0x10] sm:$0xff]
    %v190 = vld [vmem:[%s4 + $0x18] sm:$0xff]
    %192 = vset.pattern.permute.xlu0 0
    %193 = vperm.xlu0 %192, %v187
    %v194 = vpop.permute.xlu0 %193
    %197 = vset.pattern.permute.xlu0 0
    %198 = vperm.xlu0 %197, %v188
    %v199 = vpop.permute.xlu0 %198
    %202 = vset.pattern.permute.xlu0 0
    %203 = vperm.xlu0 %202, %v189
    %v204 = vpop.permute.xlu0 %203
    %207 = vset.pattern.permute.xlu0 0
    %208 = vperm.xlu0 %207, %v190
    %v209 = vpop.permute.xlu0 %208
    %v215 = vunpack.c.l.b16 %v181
    %v216 = vunpack.c.l.b16 %v182
    %v217 = vunpack.c.l.b16 %v183
    %v218 = vunpack.c.l.b16 %v184
    %v219 = vpack.c.b16 %v216, %v215
    %v220 = vpack.c.b16 %v218, %v217
    %vm221 = vcmask 261120
    %v223 = vsel %vm221, %v219, 0
    %v226 = vsel %vm221, %v220, 0
    %228 = vmatprep.subr.bf16.mxu0 0
    %229 = vmatpush1.bf16.msra.mxu0 0
    %230 = vmatprep.subr.bf16.mxu0 0
    %231 = vmatpush1.bf16.msra.mxu0 0
    %232 = vmatprep.subr.bf16.mxu0 0
    %233 = vmatpush1.bf16.msra.mxu0 0
    %234 = vmatprep.subr.bf16.mxu0 0
    %235 = vmatpush1.bf16.msra.mxu0 0
    %236 = vmatprep.subr.bf16.mxu0 0
    %237 = vmatpush1.bf16.msra.mxu0 0
    %238 = vmatprep.subr.bf16.mxu0 0
    %239 = vmatpush1.bf16.msra.mxu0 0
    %240 = vmatprep.subr.bf16.mxu0 0
    %241 = vmatpush1.bf16.msra.mxu0 %v186
    %242 = vmatprep.subr.bf16.mxu0 0
    %243 = vmatpush1.bf16.msra.mxu0 %v185
    %244 = vmatprep.subr.bf16.mxu0 0
    %245 = vmatpush2.bf16.msra.mxu0 0
    %246 = vmatprep.subr.bf16.mxu0 0
    %247 = vmatpush2.bf16.msra.mxu0 0
    %248 = vmatprep.subr.bf16.mxu0 0
    %249 = vmatpush2.bf16.msra.mxu0 0
    %250 = vmatprep.subr.bf16.mxu0 0
    %251 = vmatpush2.bf16.msra.mxu0 0
    %252 = vmatprep.subr.bf16.mxu0 0
    %253 = vmatpush2.bf16.msra.mxu0 0
    %254 = vmatprep.subr.bf16.mxu0 0
    %255 = vmatpush2.bf16.msra.mxu0 0
    %256 = vmatprep.subr.bf16.mxu0 0
    %257 = vmatpush2.bf16.msra.mxu0 0
    %258 = vmatprep.subr.bf16.mxu0 0
    %259 = vmatpush2.bf16.msra.mxu0 0
    %260 = vmatprep.mubr.bf16.mxu0 0
    %261 = vmatmul.mubr.bf16.gmra.mxu0 %v223
    %v262 = vpop.f32.mrf.mxu0
    %v263 = vadd.f32 %v194, %v262
    %v264 = vpop.f32.mrf.mxu0
    %v265 = vpop.f32.mrf.mxu0
    %v266 = vadd.f32 %v199, %v265
    %v267 = vpop.f32.mrf.mxu0
    %268 = vmatprep.mubr.bf16.mxu0 0
    %269 = vmatmul.mubr.bf16.gmra.mxu0 %v226
    %v270 = vpop.f32.mrf.mxu0
    %v271 = vadd.f32 %v204, %v270
    %v272 = vpop.f32.mrf.mxu0
    %v273 = vpop.f32.mrf.mxu0
    %v274 = vadd.f32 %v209, %v273
    %v275 = vpop.f32.mrf.mxu0
    %276 = vdwg.mxu0
    %v277 = vmul.f32 %v263, 0.01
    %v278 = vmul.f32 %v266, 0.01
    %v279 = vmul.f32 %v271, 0.01
    %v280 = vmul.f32 %v274, 0.01
    %v281 = vmax.f32 %v263, %v277
    %v282 = vmax.f32 %v266, %v278
    %v283 = vmax.f32 %v271, %v279
    %v284 = vmax.f32 %v274, %v280
    %v285 = vld [vmem:[%s5] sm:$0x3]
    %v286 = vpack.c.bf16 %v282, %v281
    %v287 = vpack.c.bf16 %v284, %v283
    %v288 = vld [vmem:[%s6] sm:$0xf]
    %290 = vset.pattern.permute.xlu0 0
    %291 = vperm.xlu0 %290, %v288
    %v292 = vpop.permute.xlu0 %291
    %v295 = vsel %vm221, %v285, 0
    %297 = vmatprep.subr.bf16.mxu0 0
    %298 = vmatpush1.bf16.msra.mxu0 0
    %299 = vmatprep.subr.bf16.mxu0 0
    %300 = vmatpush1.bf16.msra.mxu0 0
    %301 = vmatprep.subr.bf16.mxu0 0
    %302 = vmatpush1.bf16.msra.mxu0 0
    %303 = vmatprep.subr.bf16.mxu0 0
    %304 = vmatpush1.bf16.msra.mxu0 0
    %305 = vmatprep.subr.bf16.mxu0 0
    %306 = vmatpush1.bf16.msra.mxu0 0
    %307 = vmatprep.subr.bf16.mxu0 0
    %308 = vmatpush1.bf16.msra.mxu0 0
    %309 = vmatprep.subr.bf16.mxu0 0
    %310 = vmatpush1.bf16.msra.mxu0 %v287
    %311 = vmatprep.subr.bf16.mxu0 0
    %312 = vmatpush1.bf16.msra.mxu0 %v286
    %313 = vmatprep.subr.bf16.mxu0 0
    %314 = vmatpush2.bf16.msra.mxu0 0
    %315 = vmatprep.subr.bf16.mxu0 0
    %316 = vmatpush2.bf16.msra.mxu0 0
    %317 = vmatprep.subr.bf16.mxu0 0
    %318 = vmatpush2.bf16.msra.mxu0 0
    %319 = vmatprep.subr.bf16.mxu0 0
    %320 = vmatpush2.bf16.msra.mxu0 0
    %321 = vmatprep.subr.bf16.mxu0 0
    %322 = vmatpush2.bf16.msra.mxu0 0
    %323 = vmatprep.subr.bf16.mxu0 0
    %324 = vmatpush2.bf16.msra.mxu0 0
    %325 = vmatprep.subr.bf16.mxu0 0
    %326 = vmatpush2.bf16.msra.mxu0 0
    %327 = vmatprep.subr.bf16.mxu0 0
    %328 = vmatpush2.bf16.msra.mxu0 0
    %329 = vmatprep.mubr.bf16.mxu0 0
    %330 = vmatmul.mubr.bf16.gmra.mxu0 %v295
    %v331 = vpop.f32.mrf.mxu0
    %v332 = vadd.f32 %v292, %v331
    %v333 = vpop.f32.mrf.mxu0
    %v334 = vpop.f32.mrf.mxu0
    %v335 = vpop.f32.mrf.mxu0
    %336 = vdwg.mxu0
    %vm337 = vcmask 1043456
    %v338 = vsel %vm337, %v332, -inf
    %v339 = vrot.slane %v338, 4
    %v340 = vmax.f32 %v338, %v339
    %v341 = vrot.slane %v340, 2
    %v342 = vmax.f32 %v340, %v341
    %v343 = vrot.slane %v342, 1
    %v344 = vmax.f32 %v342, %v343
    %v345 = vsub.f32 %v332, %v344
    %v346 = vmul.f32 %v345, 1.442695
    %v347 = vpow.pop %v346
    %v348 = vsel %vm337, %v347, 0.0
    %v349 = vrot.slane %v348, 4
    %v350 = vadd.f32 %v348, %v349
    %v351 = vrot.slane %v350, 2
    %v352 = vadd.f32 %v350, %v351
    %v353 = vrot.slane %v352, 1
    %v354 = vadd.f32 %v352, %v353
    %v355 = vrcp.pop %v354
    %v356 = vmul.f32 %v347, %v355
    %357 = vst [vmem:[#allocation2] sm:$0xf] %v356
    // Predicated region
    $region30: #{tpu_custom_call.1} parent=1 // pred_check
      _
    $region31: #{tpu_custom_call.1} parent=1 // pred_check_branch
      %359 = sbr.rel (0) target = $region33
    $region32: #{tpu_custom_call.1} parent=1 // pred_region
      %s361 = ssub.s32 64, 64
      %362 = vsyncadd [#allocation3], %s361
      %s364 = sshll.u32 [#allocation2], 4
      %s365 = int_to_ptr.vmem [resolvable:$true] %s364
      %367 = dma.vmem_to_hbm [thread:$0]  %s365, 64, %s7, [#allocation3]
    $region33: #{tpu_custom_call.1} parent=1 // pred_fallthru
      _
    // Predicated region
    $region34: #{tpu_custom_call.1} parent=1 // pred_check
      _
    $region35: #{tpu_custom_call.1} parent=1 // pred_check_branch
      %369 = sbr.rel (0) target = $region37
    $region36: #{tpu_custom_call.1} parent=1 // pred_region
      %370 = dma.done [#allocation3], 64
    $region37: #{tpu_custom_call.1} parent=1 // pred_fallthru
      _
    %371 = vsyncpa [#allocation3], 1

</llo_original>
